<compile_context>
chip_gen: v5e
topology: v5e:2x2
jax: 0.10.0
libtpu: 0.0.40
codegen_flags: <defaults>
</compile_context>

<pallas_src>
import functools

import jax
import jax.numpy as jnp
from jax.experimental import pallas as pl
from jax.experimental.pallas import tpu as pltpu

EPS = 1e-5
_VMEM_LIMIT_BYTES = 48 * 1024 * 1024


def _compiler_params(n_grid_dims):
    return pltpu.CompilerParams(
        dimension_semantics=("parallel",) * n_grid_dims,
        vmem_limit_bytes=_VMEM_LIMIT_BYTES,
    )


def _affine_relu(flat, scale, shift):
    """f32 (R, C) * (1, C) + (1, C), then relu.  One FMA + max per element."""
    return jnp.maximum(flat * scale + shift, 0.0)


# --------------------------------------------------------------------------- #
# Stage A: h = relu(bn1(x)); o1 = h @ w1 (1x1 conv); optional 1x1 shortcut.    #
# Also emits per-block (sum, sum_sq) of o1 so bn2 stats need no extra HBM pass #
# --------------------------------------------------------------------------- #
def _stage_a_kernel(stride, has_shortcut, *refs):
    if has_shortcut and stride > 1:
        (x_ref, s1_ref, b1_ref, w1_ref, ws_ref, xs_ref,
         o1_ref, st_ref, sc_ref) = refs
    elif has_shortcut:
        (x_ref, s1_ref, b1_ref, w1_ref, ws_ref,
         o1_ref, st_ref, sc_ref) = refs
    else:
        (x_ref, s1_ref, b1_ref, w1_ref, o1_ref, st_ref) = refs

    _, th, W, Cin = x_ref.shape
    P = w1_ref.shape[1]

    x = x_ref[0].astype(jnp.float32).reshape(th * W, Cin)
    h = _affine_relu(x, s1_ref[...], b1_ref[...])

    # 1x1 conv == channel matmul; bf16 operands feed the MXU, f32 accumulate.
    o1 = jnp.dot(h.astype(jnp.bfloat16), w1_ref[...],
                 preferred_element_type=jnp.float32)            # (th*W, P)
    o1_ref[0] = o1.reshape(th, W, P)

    # partial per-channel sums for bn2 (finished in the wrapper)
    st_ref[0, 0, 0:1, :] = jnp.sum(o1, axis=0, keepdims=True)
    st_ref[0, 0, 1:2, :] = jnp.sum(o1 * o1, axis=0, keepdims=True)

    if has_shortcut:
        if stride == 1:
            hs = h
        else:
            _, tho, Wo, _ = xs_ref.shape
            xs = xs_ref[0].astype(jnp.float32).reshape(tho * Wo, Cin)
            hs = _affine_relu(xs, s1_ref[...], b1_ref[...])
        sc = jnp.dot(hs.astype(jnp.bfloat16), ws_ref[...],
                     preferred_element_type=jnp.float32)
        _, tho, Wo, C4 = sc_ref.shape
        sc_ref[0] = sc.reshape(tho, Wo, C4)


# --------------------------------------------------------------------------- #
# Stage B: h2 = relu(bn2(o1)); o2 = conv3x3(h2, stride) as one im2col matmul.  #
# --------------------------------------------------------------------------- #
def _stage_b_kernel(stride, ph_ref, s2_ref, b2_ref, w2_ref,
                    o2_ref, st_ref, pad_ref):
    nph = stride * stride
    _, Ho, Wo, P = o2_ref.shape
    scale = s2_ref[...]
    shift = b2_ref[...]

    zrow = jnp.zeros((1, Wo + 2, P), jnp.float32)
    zcol = jnp.zeros((Ho + 2, 1, P), jnp.float32)
    for p in range(nph):
        # bn2 + relu on one spatial phase of o1, written into the scratch
        # interior; only the 1-pixel halo strips are zeroed (no full memset).
        a = ph_ref[0, p * Ho:(p + 1) * Ho, :, :].astype(jnp.float32)
        hph = _affine_relu(a.reshape(Ho * Wo, P), scale, shift)
        pad_ref[p, 0:1, :, :] = zrow
        pad_ref[p, Ho + 1:Ho + 2, :, :] = zrow
        pad_ref[p, :, 0:1, :] = zcol
        pad_ref[p, :, Wo + 1:Wo + 2, :] = zcol
        pad_ref[p, 1:Ho + 1, 1:Wo + 1, :] = hph.reshape(Ho, Wo, P)

    phases = [pad_ref[p] for p in range(nph)]

    # im2col: 9 contiguous taps -> one (Ho*Wo, 9*P) bf16 slab -> single matmul.
    taps = []
    for kh in range(3):
        rp = (kh - 1) % stride
        r0 = 1 + (kh - 1 - rp) // stride
        for kw in range(3):
            cp = (kw - 1) % stride
            c0 = 1 + (kw - 1 - cp) // stride
            tap = phases[rp * stride + cp][r0:r0 + Ho, c0:c0 + Wo, :]
            taps.append(tap.reshape(Ho * Wo, P).astype(jnp.bfloat16))
    patches = jnp.concatenate(taps, axis=1)                      # (Ho*Wo, 9*P)
    o2 = jnp.dot(patches, w2_ref[...], preferred_element_type=jnp.float32)
    o2_ref[0] = o2.reshape(Ho, Wo, P)

    # partial per-channel sums for bn3 (finished in the wrapper)
    st_ref[0, 0:1, :] = jnp.sum(o2, axis=0, keepdims=True)
    st_ref[0, 1:2, :] = jnp.sum(o2 * o2, axis=0, keepdims=True)


# --------------------------------------------------------------------------- #
# Stage C: out = conv1x1(relu(bn3(o2))) + shortcut, lane-dense store.          #
# --------------------------------------------------------------------------- #
def _stage_c_kernel(lane_dense, o2_ref, s3_ref, b3_ref, w3_ref, res_ref, out_ref):
    _, tho, Wo, P = o2_ref.shape
    C4 = w3_ref.shape[1]
    o2 = o2_ref[0].astype(jnp.float32).reshape(tho * Wo, P)
    h3 = _affine_relu(o2, s3_ref[...], b3_ref[...])
    o3 = jnp.dot(h3.astype(jnp.bfloat16), w3_ref[...],
                 preferred_element_type=jnp.float32)             # (tho*Wo, C4)
    out = o3 + res_ref[0].astype(jnp.float32).reshape(tho * Wo, C4)
    if lane_dense:
        # minor dim = Wo*C4 (multiple of 128) -> unmasked lane-dense stores
        out_ref[0] = out.reshape(tho, Wo * C4).astype(out_ref.dtype)
    else:
        out_ref[0] = out.reshape(tho, Wo, C4).astype(out_ref.dtype)


# ------------------------------- wrapper ------------------------------------ #
def _bn_scale_shift(mean, var, gamma, beta):
    scale = gamma.astype(jnp.float32) * jax.lax.rsqrt(var + EPS)
    shift = beta.astype(jnp.float32) - mean * scale
    return scale.reshape(1, -1), shift.reshape(1, -1)


def _stats_to_scale_shift(sums, sqsums, count, gamma, beta):
    mean = sums / count
    var = jnp.maximum(sqsums / count - mean * mean, 0.0)
    return _bn_scale_shift(mean, var, gamma, beta)


def _pick_row_tile(H, stride):
    t = H // 2
    if H % 2 == 0 and t > 0 and t % stride == 0:
        return t
    return H


def _pick_out_row_tile(Ho):
    t = Ho // 2
    if Ho % 2 == 0 and t > 0 and t % 8 == 0:
        return t
    return Ho


def preact_bottleneck(x, params, *, stride=1):
    """Fused PreActBottleneck forward.  x: (N, H, W, Cin) NHWC, weights HWIO."""
    N, H, W, Cin = x.shape
    w1 = params["conv1_w"]          # (1, 1, Cin, P)
    w2 = params["conv2_w"]          # (3, 3, P, P)
    w3 = params["conv3_w"]          # (1, 1, P, 4*P)
    P = w1.shape[-1]
    C4 = w3.shape[-1]
    has_shortcut = (stride != 1) or (Cin != C4)
    assert H % stride == 0 and W % stride == 0
    Ho, Wo = H // stride, W // stride

    f32, bf16 = jnp.float32, jnp.bfloat16
    w1b = w1.reshape(Cin, P).astype(bf16)
    w2b = w2.reshape(9 * P, P).astype(bf16)      # HWIO flatten matches tap order
    w3b = w3.reshape(P, C4).astype(bf16)

    # bn1 statistics: single-pass per-channel reduction, hoisted into XLA.
    xf = x.reshape(-1, Cin).astype(f32)
    m1 = jnp.mean(xf, axis=0)
    v1 = jnp.maximum(jnp.mean(xf * xf, axis=0) - m1 * m1, 0.0)
    scale1, shift1 = _bn_scale_shift(m1, v1, params["bn1_gamma"], params["bn1_beta"])

    # ------------------------------- stage A ---------------------------------
    th = _pick_row_tile(H, stride)
    n_row_tiles = H // th
    inputs = [x, scale1, shift1, w1b]
    in_specs = [
        pl.BlockSpec((1, th, W, Cin), lambda n, t: (n, t, 0, 0)),
        pl.BlockSpec((1, Cin), lambda n, t: (0, 0)),
        pl.BlockSpec((1, Cin), lambda n, t: (0, 0)),
        pl.BlockSpec((Cin, P), lambda n, t: (0, 0)),
    ]
    out_shape = [jax.ShapeDtypeStruct((N, H, W, P), f32),
                 jax.ShapeDtypeStruct((N, n_row_tiles, 2, P), f32)]
    out_specs = [pl.BlockSpec((1, th, W, P), lambda n, t: (n, t, 0, 0)),
                 pl.BlockSpec((1, 1, 2, P), lambda n, t: (n, t, 0, 0))]
    if has_shortcut:
        wsb = params["shortcut_w"].reshape(Cin, C4).astype(bf16)
        inputs.append(wsb)
        in_specs.append(pl.BlockSpec((Cin, C4), lambda n, t: (0, 0)))
        if stride > 1:
            inputs.append(x[:, ::stride, ::stride, :])   # strided slice in XLA
            in_specs.append(pl.BlockSpec((1, th // stride, Wo, Cin),
                                         lambda n, t: (n, t, 0, 0)))
        out_shape.append(jax.ShapeDtypeStruct((N, Ho, Wo, C4), f32))
        out_specs.append(pl.BlockSpec((1, th // stride, Wo, C4),
                                      lambda n, t: (n, t, 0, 0)))

    outs = pl.pallas_call(
        functools.partial(_stage_a_kernel, stride, has_shortcut),
        grid=(N, n_row_tiles),
        in_specs=in_specs,
        out_shape=out_shape,
        out_specs=out_specs,
        compiler_params=_compiler_params(2),
    )(*inputs)
    if has_shortcut:
        o1, stats1, sc = outs
    else:
        o1, stats1 = outs
        sc = x                                    # identity shortcut

    # bn2 scale/shift from stage-A partial sums.
    scale2, shift2 = _stats_to_scale_shift(
        jnp.sum(stats1[:, :, 0, :], axis=(0, 1)),
        jnp.sum(stats1[:, :, 1, :], axis=(0, 1)),
        float(N * H * W), params["bn2_gamma"], params["bn2_beta"])

    # Spatial even/odd phase pre-split so stride-2 conv taps stay contiguous.
    if stride == 1:
        o1_ph = o1
    else:
        o1_ph = jnp.concatenate(
            [o1[:, r::stride, c::stride, :]
             for r in range(stride) for c in range(stride)], axis=1)
    nph = stride * stride

    # ------------------------------- stage B ---------------------------------
    o2, stats2 = pl.pallas_call(
        functools.partial(_stage_b_kernel, stride),
        grid=(N,),
        in_specs=[
            pl.BlockSpec((1, nph * Ho, Wo, P), lambda n: (n, 0, 0, 0)),
            pl.BlockSpec((1, P), lambda n: (0, 0)),
            pl.BlockSpec((1, P), lambda n: (0, 0)),
            pl.BlockSpec((9 * P, P), lambda n: (0, 0)),
        ],
        out_shape=[jax.ShapeDtypeStruct((N, Ho, Wo, P), f32),
                   jax.ShapeDtypeStruct((N, 2, P), f32)],
        out_specs=[pl.BlockSpec((1, Ho, Wo, P), lambda n: (n, 0, 0, 0)),
                   pl.BlockSpec((1, 2, P), lambda n: (n, 0, 0))],
        scratch_shapes=[pltpu.VMEM((nph, Ho + 2, Wo + 2, P), f32)],
        compiler_params=_compiler_params(1),
    )(o1_ph, scale2, shift2, w2b)

    # bn3 scale/shift from stage-B partial sums.
    scale3, shift3 = _stats_to_scale_shift(
        jnp.sum(stats2[:, 0, :], axis=0), jnp.sum(stats2[:, 1, :], axis=0),
        float(N * Ho * Wo), params["bn3_gamma"], params["bn3_beta"])

    # ------------------------------- stage C ---------------------------------
    tho = _pick_out_row_tile(Ho)
    n_out_tiles = Ho // tho
    lane_dense = (Wo * C4) % 128 == 0
    if lane_dense:
        out_shape_c = jax.ShapeDtypeStruct((N, Ho, Wo * C4), x.dtype)
        out_spec_c = pl.BlockSpec((1, tho, Wo * C4), lambda n, t: (n, t, 0))
    else:
        out_shape_c = jax.ShapeDtypeStruct((N, Ho, Wo, C4), x.dtype)
        out_spec_c = pl.BlockSpec((1, tho, Wo, C4), lambda n, t: (n, t, 0, 0))

    out = pl.pallas_call(
        functools.partial(_stage_c_kernel, lane_dense),
        grid=(N, n_out_tiles),
        in_specs=[
            pl.BlockSpec((1, tho, Wo, P), lambda n, t: (n, t, 0, 0)),
            pl.BlockSpec((1, P), lambda n, t: (0, 0)),
            pl.BlockSpec((1, P), lambda n, t: (0, 0)),
            pl.BlockSpec((P, C4), lambda n, t: (0, 0)),
            pl.BlockSpec((1, tho, Wo, C4), lambda n, t: (n, t, 0, 0)),
        ],
        out_shape=out_shape_c,
        out_specs=out_spec_c,
        compiler_params=_compiler_params(2),
    )(o2, scale3, shift3, w3b, sc)
    return out.reshape(N, Ho, Wo, C4)


# ------------------------- pure-JAX reference (validation) ------------------ #
def _reference(x, params, *, stride=1):
    f32, bf16 = jnp.float32, jnp.bfloat16

    def bn_relu(h, g, b):
        m = h.mean(axis=(0, 1, 2), keepdims=True)
        v = ((h - m) ** 2).mean(axis=(0, 1, 2), keepdims=True)
        return jnp.maximum((h - m) * jax.lax.rsqrt(v + EPS) * g + b, 0.0)

    def conv(h, w, s):
        pad = ((1, 1), (1, 1)) if w.shape[0] == 3 else ((0, 0), (0, 0))
        # operands cast to bf16 / f32 accumulate, matching the kernel's MXU path
        return jax.lax.conv_general_dilated(
            h.astype(bf16), w.astype(bf16), window_strides=(s, s), padding=pad,
            dimension_numbers=("NHWC", "HWIO", "NHWC"),
            preferred_element_type=f32)

    C4 = params["conv3_w"].shape[-1]
    has_shortcut = (stride != 1) or (x.shape[-1] != C4)
    h1 = bn_relu(x.astype(f32), params["bn1_gamma"], params["bn1_beta"])
    sc = conv(h1, params["shortcut_w"], stride) if has_shortcut else x
    o = conv(h1, params["conv1_w"], 1)
    o = conv(bn_relu(o, params["bn2_gamma"], params["bn2_beta"]),
             params["conv2_w"], stride)
    o = conv(bn_relu(o, params["bn3_gamma"], params["bn3_beta"]),
             params["conv3_w"], 1)
    return o + sc


def _make_params(key, in_planes, planes):
    C4 = 4 * planes
    ks = jax.random.split(key, 10)
    rnd = lambda k, shape: 0.1 * jax.random.normal(k, shape, jnp.float32)
    return {
        "bn1_gamma": 1.0 + rnd(ks[0], (in_planes,)),
        "bn1_beta": rnd(ks[1], (in_planes,)),
        "conv1_w": rnd(ks[2], (1, 1, in_planes, planes)),
        "bn2_gamma": 1.0 + rnd(ks[3], (planes,)),
        "bn2_beta": rnd(ks[4], (planes,)),
        "conv2_w": rnd(ks[5], (3, 3, planes, planes)),
        "bn3_gamma": 1.0 + rnd(ks[6], (planes,)),
        "bn3_beta": rnd(ks[7], (planes,)),
        "conv3_w": rnd(ks[8], (1, 1, planes, C4)),
        "shortcut_w": rnd(ks[9], (1, 1, in_planes, C4)),
    }


if __name__ == "__main__":
    key = jax.random.PRNGKey(0)
    N, H, W = 2, 16, 16
    configs = [
        # (in_planes, planes, stride)
        (16, 4, 1),   # identity shortcut (in_planes == 4*planes, stride 1)
        (8, 4, 1),    # 1x1 conv shortcut, stride 1
        (8, 4, 2),    # 1x1 conv shortcut, stride 2 (downsampling block)
    ]
    for idx, (in_planes, planes, stride) in enumerate(configs):
        kx, kp = jax.random.split(jax.random.fold_in(key, idx))
        x = jax.random.normal(kx, (N, H, W, in_planes), jnp.float32)
        params = _make_params(kp, in_planes, planes)

        out = jax.block_until_ready(preact_bottleneck(x, params, stride=stride))
        ref = _reference(x, params, stride=stride)
        assert out.shape == ref.shape, (out.shape, ref.shape)
        err = float(jnp.max(jnp.abs(out - ref)))
        assert jnp.allclose(out, ref, atol=1e-2, rtol=1e-2), (idx, err)

    print("KERNEL_OK")
</pallas_src>

<mosaic_0001>
module attributes {stable_mosaic.version = 11 : i64} {
  func.func @_stage_a_kernel(%arg0: i32, %arg1: i32, %arg2: memref<1x8x16x16xf32, #tpu.memory_space<vmem>>, %arg3: memref<1x16xf32, #tpu.memory_space<vmem>>, %arg4: memref<1x16xf32, #tpu.memory_space<vmem>>, %arg5: memref<16x4xbf16, #tpu.memory_space<vmem>>, %arg6: memref<1x8x16x4xf32, #tpu.memory_space<vmem>>, %arg7: memref<1x1x2x4xf32, #tpu.memory_space<vmem>>) attributes {dimension_semantics = [#tpu.dimension_semantics<parallel>, #tpu.dimension_semantics<parallel>], iteration_bounds = array<i64: 2, 2>, scalar_prefetch = 0 : i64, scratch_operands = 0 : i64, tpu.core_type = #tpu.core_type<tc>, window_params = [{transform_indices = @transform_0, window_bounds = array<i64: 1, 8, 16, 16>}, {pipeline_mode = #tpu.pipeline_mode<synchronous>, transform_indices = @transform_1, window_bounds = array<i64: 1, 16>}, {pipeline_mode = #tpu.pipeline_mode<synchronous>, transform_indices = @transform_2, window_bounds = array<i64: 1, 16>}, {pipeline_mode = #tpu.pipeline_mode<synchronous>, transform_indices = @transform_3, window_bounds = array<i64: 16, 4>}, {transform_indices = @transform_4, window_bounds = array<i64: 1, 8, 16, 4>}, {transform_indices = @transform_5, window_bounds = array<i64: 1, 1, 2, 4>}]} {
    %c0 = arith.constant 0 : index
    %c0_0 = arith.constant 0 : index
    %c0_1 = arith.constant 0 : index
    %c0_2 = arith.constant 0 : index
    %0 = vector.load %arg2[%c0, %c0_0, %c0_1, %c0_2] : memref<1x8x16x16xf32, #tpu.memory_space<vmem>>, vector<1x8x16x16xf32>
    %1 = vector.shape_cast %0 : vector<1x8x16x16xf32> to vector<8x16x16xf32>
    %2 = vector.shape_cast %1 : vector<8x16x16xf32> to vector<128x16xf32>
    %c0_3 = arith.constant 0 : index
    %c0_4 = arith.constant 0 : index
    %3 = vector.load %arg3[%c0_3, %c0_4] : memref<1x16xf32, #tpu.memory_space<vmem>>, vector<1x16xf32>
    %c0_5 = arith.constant 0 : index
    %c0_6 = arith.constant 0 : index
    %4 = vector.load %arg4[%c0_5, %c0_6] : memref<1x16xf32, #tpu.memory_space<vmem>>, vector<1x16xf32>
    %5 = vector.broadcast %3 : vector<1x16xf32> to vector<128x16xf32>
    %6 = arith.mulf %2, %5 : vector<128x16xf32>
    %7 = vector.broadcast %4 : vector<1x16xf32> to vector<128x16xf32>
    %8 = arith.addf %6, %7 : vector<128x16xf32>
    %cst = arith.constant 0.000000e+00 : f32
    %9 = vector.broadcast %cst : f32 to vector<128x16xf32>
    %10 = arith.maximumf %8, %9 : vector<128x16xf32>
    %11 = arith.truncf %10 : vector<128x16xf32> to vector<128x16xbf16>
    %c0_7 = arith.constant 0 : index
    %c0_8 = arith.constant 0 : index
    %12 = vector.load %arg5[%c0_7, %c0_8] : memref<16x4xbf16, #tpu.memory_space<vmem>>, vector<16x4xbf16>
    %cst_9 = arith.constant dense<0.000000e+00> : vector<128x4xf32>
    %13 = tpu.matmul %11, %12, %cst_9 {dimension_numbers = #tpu.dot_dimension_numbers<[1], [0], [0], [1], [0, 0, 1, 1], [], []>} : vector<128x16xbf16>, vector<16x4xbf16>, vector<128x4xf32> -> vector<128x4xf32>
    %14 = vector.shape_cast %13 : vector<128x4xf32> to vector<8x16x4xf32>
    %c0_10 = arith.constant 0 : index
    %c0_11 = arith.constant 0 : index
    %c0_12 = arith.constant 0 : index
    %c0_13 = arith.constant 0 : index
    %15 = vector.load %arg6[%c0_10, %c0_11, %c0_12, %c0_13] : memref<1x8x16x4xf32, #tpu.memory_space<vmem>>, vector<1x8x16x4xf32>
    %16 = vector.shape_cast %15 : vector<1x8x16x4xf32> to vector<8x16x4xf32>
    %17 = vector.shape_cast %14 : vector<8x16x4xf32> to vector<1x8x16x4xf32>
    tpu.vector_store %arg6[%c0_10, %c0_11, %c0_12, %c0_13], %17 {strides = array<i32>} : memref<1x8x16x4xf32, #tpu.memory_space<vmem>>, vector<1x8x16x4xf32>,
    %cst_14 = arith.constant dense<0.000000e+00> : vector<4xf32>
    %18 = vector.multi_reduction <add>, %13, %cst_14 [0] : vector<128x4xf32> to vector<4xf32>
    %19 = vector.shape_cast %18 : vector<4xf32> to vector<1x4xf32>
    %c0_15 = arith.constant 0 : index
    %c0_16 = arith.constant 0 : index
    %c0_17 = arith.constant 0 : index
    %c0_18 = arith.constant 0 : index
    %20 = vector.load %arg7[%c0_15, %c0_16, %c0_17, %c0_18] : memref<1x1x2x4xf32, #tpu.memory_space<vmem>>, vector<1x1x1x4xf32>
    %21 = vector.shape_cast %20 : vector<1x1x1x4xf32> to vector<1x4xf32>
    %22 = vector.shape_cast %19 : vector<1x4xf32> to vector<1x1x1x4xf32>
    tpu.vector_store %arg7[%c0_15, %c0_16, %c0_17, %c0_18], %22 {strides = array<i32>} : memref<1x1x2x4xf32, #tpu.memory_space<vmem>>, vector<1x1x1x4xf32>,
    %23 = arith.mulf %13, %13 : vector<128x4xf32>
    %cst_19 = arith.constant dense<0.000000e+00> : vector<4xf32>
    %24 = vector.multi_reduction <add>, %23, %cst_19 [0] : vector<128x4xf32> to vector<4xf32>
    %25 = vector.shape_cast %24 : vector<4xf32> to vector<1x4xf32>
    %c0_20 = arith.constant 0 : index
    %c0_21 = arith.constant 0 : index
    %c1 = arith.constant 1 : index
    %c0_22 = arith.constant 0 : index
    %26 = vector.load %arg7[%c0_20, %c0_21, %c1, %c0_22] : memref<1x1x2x4xf32, #tpu.memory_space<vmem>>, vector<1x1x1x4xf32>
    %27 = vector.shape_cast %26 : vector<1x1x1x4xf32> to vector<1x4xf32>
    %28 = vector.shape_cast %25 : vector<1x4xf32> to vector<1x1x1x4xf32>
    tpu.vector_store %arg7[%c0_20, %c0_21, %c1, %c0_22], %28 {strides = array<i32>} : memref<1x1x2x4xf32, #tpu.memory_space<vmem>>, vector<1x1x1x4xf32>,
    return
  }
  func.func @transform_0(%arg0: i32, %arg1: i32) -> (i32, i32, i32, i32) {
    %c0_i32 = arith.constant 0 : i32
    %c0_i32_0 = arith.constant 0 : i32
    %c0_i32_1 = arith.constant 0 : i32
    return %arg0, %arg1, %c0_i32, %c0_i32_0 : i32, i32, i32, i32
  }
  func.func @transform_1(%arg0: i32, %arg1: i32) -> (i32, i32) {
    %c0_i32 = arith.constant 0 : i32
    %c0_i32_0 = arith.constant 0 : i32
    %c0_i32_1 = arith.constant 0 : i32
    return %c0_i32, %c0_i32_0 : i32, i32
  }
  func.func @transform_2(%arg0: i32, %arg1: i32) -> (i32, i32) {
    %c0_i32 = arith.constant 0 : i32
    %c0_i32_0 = arith.constant 0 : i32
    %c0_i32_1 = arith.constant 0 : i32
    return %c0_i32, %c0_i32_0 : i32, i32
  }
  func.func @transform_3(%arg0: i32, %arg1: i32) -> (i32, i32) {
    %c0_i32 = arith.constant 0 : i32
    %c0_i32_0 = arith.constant 0 : i32
    %c0_i32_1 = arith.constant 0 : i32
    return %c0_i32, %c0_i32_0 : i32, i32
  }
  func.func @transform_4(%arg0: i32, %arg1: i32) -> (i32, i32, i32, i32) {
    %c0_i32 = arith.constant 0 : i32
    %c0_i32_0 = arith.constant 0 : i32
    %c0_i32_1 = arith.constant 0 : i32
    return %arg0, %arg1, %c0_i32, %c0_i32_0 : i32, i32, i32, i32
  }
  func.func @transform_5(%arg0: i32, %arg1: i32) -> (i32, i32, i32, i32) {
    %c0_i32 = arith.constant 0 : i32
    %c0_i32_0 = arith.constant 0 : i32
    %c0_i32_1 = arith.constant 0 : i32
    return %arg0, %arg1, %c0_i32, %c0_i32_0 : i32, i32, i32, i32
  }
}

</mosaic_0001>

<llo_original>
// kernel: tpu_custom_call.1
$region0: #{tpu_custom_call.1}
  #allocation0 [shape = 'u32[]', space=smem, size = 0x4, offset = 0x4, fixed_abs, tag = 'smem constant byte address 0x4 - core index']
  #allocation1 [shape = 'u32[72,128]{1,0:T(1,128)}', space=vmem, size = 0x9000, scoped, tag = 'internal scratch']
  %s0 = inlined_call_operand.hbm [shape: f32[2,16,16,16], index: 0, kind: input, shape index: {}]
  %s1 = inlined_call_operand.vmem [shape: f32[1,16], index: 1, kind: input, shape index: {}]
  %s2 = inlined_call_operand.vmem [shape: f32[1,16], index: 2, kind: input, shape index: {}]
  %s3 = inlined_call_operand.vmem [shape: bf16[16,4], index: 3, kind: input, shape index: {}]
  %s4 = inlined_call_operand.vmem [shape: f32[2,16,16,4], index: 4, kind: output, shape index: {0}]
  %s5 = inlined_call_operand.hbm [shape: f32[2,2,2,4], index: 5, kind: output, shape index: {1}]
  %6 = xla_tuple %s4, %s5
  %s7 = sld [smem:[#allocation0]]
  $region61: #{tpu_custom_call.1} parent=0
    _
  %s9 = ssub.s32 1, %s7
  %s10 = scalar_select 0, %s9, %s7
  $region1: #{tpu_custom_call.1} parent=0
    #allocation2 [shape = 'u8[131072]{0}', space=vmem, size = 0x20000, scoped, tag = 'input window, operand 0']
    #allocation3 [shape = 's32[2]{0}', space=sflag, size = 0x8, scoped, tag = 'scoped memory for tpu_custom_call.1']
    #allocation4 [shape = 's32[2]{0}', space=sflag, size = 0x8, scoped, tag = 'scoped memory for tpu_custom_call.1']
    #allocation5 [shape = 'u8[2048]{0}', space=vmem, size = 0x800, scoped, tag = 'output window, operand 1']
    %11 = vsyncpa [#allocation3], 0
    %s12 = scalar_lea.sflag [#allocation3], 1
    %13 = vsyncpa %s12, 0
    %14 = vsyncpa [#allocation4], 0
    %s15 = scalar_lea.sflag [#allocation4], 1
    %16 = vsyncpa %s15, 0
    loop: start=0, step=1, limit=6
    $region2: #{tpu_custom_call.1} parent=1 // loop_pre_header
      _
    $region3: #{tpu_custom_call.1} parent=1 // loop_header
      %s18 = sphi 0, %s22
      %p19 = scmp.ge.s32.totalorder %s18, 6
      %s25 = sphi 0, %s37
      %s26 = sphi 0, %s33
      %s27 = sphi 0, %s25
      %s28 = sphi 0, %s26
      %s29 = sphi 0, %s27
      %s30 = sphi 0, %s28
      %s42 = sphi 0, %s44
      %s45 = sphi 0, %s42
      %s46 = sphi 0, %s45
      %s62 = sphi 0, %s46
      %s66 = sphi 0, %s66
      %s68 = sphi 0, %s66
      %s69 = sphi 0, %s68
      %s83 = sphi 0, %s69
      %s87 = sphi 0, %s87
      %s89 = sphi 0, %s87
      %s90 = sphi 0, %s89
      %s104 = sphi 0, %s90
      %s108 = sphi 0, %s108
      %s110 = sphi 0, %s108
      %s111 = sphi 0, %s110
      %s125 = sphi 0, %s111
      %s133 = sphi 0, %s135
      %s136 = sphi 0, %s133
      %s137 = sphi 0, %s136
      %s153 = sphi 0, %s137
      %s161 = sphi 0, %s163
      %s164 = sphi 0, %s161
      %s165 = sphi 0, %s164
      %s181 = sphi 0, %s165
    $region4: #{tpu_custom_call.1} parent=1 // loop_header_branch
      %21 = sbr.rel (%p19) target = $region8
    $region5: #{tpu_custom_call.1} parent=1 // loop_body
      %s23 = ssub.s32 %s18, 1
      %s24 = ssub.s32 %s18, 2
      %s31 = sadd.s32 1, %s26
      %p32 = scmp.ge.s32.totalorder %s31, 2
      %s33 = scalar_select %p32, 0, %s31
      %s34 = sadd.s32 1, %s25
      %s35 = scalar_select %p32, %s34, %s25
      %p36 = scmp.ge.s32.totalorder %s35, 2
      %s37 = scalar_select %p36, 0, %s35
      %s38 = ssub.s32 %s25, %s37
      %s39 = ssub.s32 %s26, %s33
      %s40 = sor.u32 %s38, %s39
      %p41 = scmp.eq.s32.totalorder %s40, 0
      %s43 = sadd.s32 %s42, 1
      %s44 = scalar_select %p41, %s42, %s43
      %p47 = pneg %p41
      %p48 = scmp.eq.s32.totalorder %s18, 3
      %p49 = por %p47, %p48
      %p50 = scmp.ne.s32.totalorder %s42, %s45
      %p51 = scmp.eq.s32.totalorder %s18, 0
      %p52 = por %p50, %p51
      %p53 = scmp.ne.s32.totalorder %s42, %s45
      %p54 = scmp.eq.s32.totalorder %s23, 3
      %p55 = por %p53, %p54
      %p56 = scmp.ne.s32.totalorder %s45, %s46
      %p57 = scmp.eq.s32.totalorder %s23, 0
      %p58 = por %p56, %p57
      %p59 = scmp.ne.s32.totalorder %s45, %s46
      %p60 = scmp.eq.s32.totalorder %s24, 3
      %p61 = por %p59, %p60
      %p63 = scmp.ne.s32.totalorder %s46, %s62
      %p64 = scmp.eq.s32.totalorder %s24, 0
      %p65 = por %p63, %p64
      %s67 = sadd.s32 %s66, 1
      %p70 = scmp.eq.s32.totalorder %s18, 3
      %p71 = scmp.ne.s32.totalorder %s66, %s68
      %p72 = scmp.eq.s32.totalorder %s18, 0
      %p73 = por %p71, %p72
      %p74 = scmp.ne.s32.totalorder %s66, %s68
      %p75 = scmp.eq.s32.totalorder %s23, 3
      %p76 = por %p74, %p75
      %p77 = scmp.ne.s32.totalorder %s68, %s69
      %p78 = scmp.eq.s32.totalorder %s23, 0
      %p79 = por %p77, %p78
      %p80 = scmp.ne.s32.totalorder %s68, %s69
      %p81 = scmp.eq.s32.totalorder %s24, 3
      %p82 = por %p80, %p81
      %p84 = scmp.ne.s32.totalorder %s69, %s83
      %p85 = scmp.eq.s32.totalorder %s24, 0
      %p86 = por %p84, %p85
      %s88 = sadd.s32 %s87, 1
      %p91 = scmp.eq.s32.totalorder %s18, 3
      %p92 = scmp.ne.s32.totalorder %s87, %s89
      %p93 = scmp.eq.s32.totalorder %s18, 0
      %p94 = por %p92, %p93
      %p95 = scmp.ne.s32.totalorder %s87, %s89
      %p96 = scmp.eq.s32.totalorder %s23, 3
      %p97 = por %p95, %p96
      %p98 = scmp.ne.s32.totalorder %s89, %s90
      %p99 = scmp.eq.s32.totalorder %s23, 0
      %p100 = por %p98, %p99
      %p101 = scmp.ne.s32.totalorder %s89, %s90
      %p102 = scmp.eq.s32.totalorder %s24, 3
      %p103 = por %p101, %p102
      %p105 = scmp.ne.s32.totalorder %s90, %s104
      %p106 = scmp.eq.s32.totalorder %s24, 0
      %p107 = por %p105, %p106
      %s109 = sadd.s32 %s108, 1
      %p112 = scmp.eq.s32.totalorder %s18, 3
      %p113 = scmp.ne.s32.totalorder %s108, %s110
      %p114 = scmp.eq.s32.totalorder %s18, 0
      %p115 = por %p113, %p114
      %p116 = scmp.ne.s32.totalorder %s108, %s110
      %p117 = scmp.eq.s32.totalorder %s23, 3
      %p118 = por %p116, %p117
      %p119 = scmp.ne.s32.totalorder %s110, %s111
      %p120 = scmp.eq.s32.totalorder %s23, 0
      %p121 = por %p119, %p120
      %p122 = scmp.ne.s32.totalorder %s110, %s111
      %p123 = scmp.eq.s32.totalorder %s24, 3
      %p124 = por %p122, %p123
      %p126 = scmp.ne.s32.totalorder %s111, %s125
      %p127 = scmp.eq.s32.totalorder %s24, 0
      %p128 = por %p126, %p127
      %s129 = ssub.s32 %s25, %s37
      %s130 = ssub.s32 %s26, %s33
      %s131 = sor.u32 %s129, %s130
      %p132 = scmp.eq.s32.totalorder %s131, 0
      %s134 = sadd.s32 %s133, 1
      %s135 = scalar_select %p132, %s133, %s134
      %p138 = pneg %p132
      %p139 = scmp.eq.s32.totalorder %s18, 3
      %p140 = por %p138, %p139
      %p141 = scmp.ne.s32.totalorder %s133, %s136
      %p142 = scmp.eq.s32.totalorder %s18, 0
      %p143 = por %p141, %p142
      %p144 = scmp.ne.s32.totalorder %s133, %s136
      %p145 = scmp.eq.s32.totalorder %s23, 3
      %p146 = por %p144, %p145
      %p147 = scmp.ne.s32.totalorder %s136, %s137
      %p148 = scmp.eq.s32.totalorder %s23, 0
      %p149 = por %p147, %p148
      %p150 = scmp.ne.s32.totalorder %s136, %s137
      %p151 = scmp.eq.s32.totalorder %s24, 3
      %p152 = por %p150, %p151
      %p154 = scmp.ne.s32.totalorder %s137, %s153
      %p155 = scmp.eq.s32.totalorder %s24, 0
      %p156 = por %p154, %p155
      %s157 = ssub.s32 %s25, %s37
      %s158 = ssub.s32 %s26, %s33
      %s159 = sor.u32 %s157, %s158
      %p160 = scmp.eq.s32.totalorder %s159, 0
      %s162 = sadd.s32 %s161, 1
      %s163 = scalar_select %p160, %s161, %s162
      %p166 = pneg %p160
      %p167 = scmp.eq.s32.totalorder %s18, 3
      %p168 = por %p166, %p167
      %p169 = scmp.ne.s32.totalorder %s161, %s164
      %p170 = scmp.eq.s32.totalorder %s18, 0
      %p171 = por %p169, %p170
      %p172 = scmp.ne.s32.totalorder %s161, %s164
      %p173 = scmp.eq.s32.totalorder %s23, 3
      %p174 = por %p172, %p173
      %p175 = scmp.ne.s32.totalorder %s164, %s165
      %p176 = scmp.eq.s32.totalorder %s23, 0
      %p177 = por %p175, %p176
      %p178 = scmp.ne.s32.totalorder %s164, %s165
      %p179 = scmp.eq.s32.totalorder %s24, 3
      %p180 = por %p178, %p179
      %p182 = scmp.ne.s32.totalorder %s165, %s181
      %p183 = scmp.eq.s32.totalorder %s24, 0
      %p184 = por %p182, %p183
      %p185 = scmp.le.s32.totalorder 1, %s18
      %p186 = scmp.lt.s32.totalorder %s18, 5
      %p187 = pnand %p185, %p186
      %p188 = pneg %p187
      // Predicated region
      $region9: #{tpu_custom_call.1} parent=5 // pred_check
        _
      $region10: #{tpu_custom_call.1} parent=5 // pred_check_branch
        %190 = sbr.rel (%p187) target = $region12
      $region11: #{tpu_custom_call.1} parent=5 // pred_region
        %s191 = ssub.s32 %s18, 1
        // Predicated region
        $region13: #{tpu_custom_call.1} parent=11 // pred_check
          %p192 = pneg %p79
        $region14: #{tpu_custom_call.1} parent=11 // pred_check_branch
          %194 = sbr.rel (%p192) target = $region16
        $region15: #{tpu_custom_call.1} parent=11 // pred_region
          _
        $region16: #{tpu_custom_call.1} parent=11 // pred_fallthru
          _
        // Predicated region
        $region17: #{tpu_custom_call.1} parent=11 // pred_check
          %p195 = pneg %p100
        $region18: #{tpu_custom_call.1} parent=11 // pred_check_branch
          %197 = sbr.rel (%p195) target = $region20
        $region19: #{tpu_custom_call.1} parent=11 // pred_region
          _
        $region20: #{tpu_custom_call.1} parent=11 // pred_fallthru
          _
        // Predicated region
        $region21: #{tpu_custom_call.1} parent=11 // pred_check
          %p198 = pneg %p121
        $region22: #{tpu_custom_call.1} parent=11 // pred_check_branch
          %200 = sbr.rel (%p198) target = $region24
        $region23: #{tpu_custom_call.1} parent=11 // pred_region
          _
        $region24: #{tpu_custom_call.1} parent=11 // pred_fallthru
          _
      $region12: #{tpu_custom_call.1} parent=5 // pred_fallthru
        _
      %p201 = scmp.lt.s32.totalorder %s18, 4
      // Predicated region
      $region25: #{tpu_custom_call.1} parent=5 // pred_check
        %p202 = pneg %p201
      $region26: #{tpu_custom_call.1} parent=5 // pred_check_branch
        %204 = sbr.rel (%p202) target = $region28
      $region27: #{tpu_custom_call.1} parent=5 // pred_region
        // Predicated region
        $region29: #{tpu_custom_call.1} parent=27 // pred_check
          %p205 = pneg %p52
        $region30: #{tpu_custom_call.1} parent=27 // pred_check_branch
          %207 = sbr.rel (%p205) target = $region32
        $region31: #{tpu_custom_call.1} parent=27 // pred_region
          %s208 = sand.u32 %s42, 1
          %s209 = scalar_lea.sflag [#allocation3], %s208
          %s210 = sand.u32 %s42, 1
          %s211 = smul.addr %s210, 128
          %s212 = scalar_lea.vmem [#allocation2], %s211
          %s213 = smul.u32 8, %s26
          %215 = vsyncadd %s209, 0
          %s216 = smul.addr %s213, 2
          %s217 = smul.addr %s25, 32
          %s218 = sadd.s32 %s216, %s217
          %s219 = smul.addr %s218, 8
          %s220 = scalar_lea.hbm %s0, %s219
          %s221 = sshll.u32 %s220, 4
          %s222 = int_to_ptr.hbm [resolvable:$true] %s221
          %s223 = sshll.u32 %s212, 4
          %s224 = int_to_ptr.vmem [resolvable:$true] %s223
          %229 = dma.hbm_to_vmem [thread:$0]  %s222, 2048, %s224, %s209, 128, 128, 8
        $region32: #{tpu_custom_call.1} parent=27 // pred_fallthru
          _
      $region28: #{tpu_custom_call.1} parent=5 // pred_fallthru
        _
      %p230 = scmp.le.s32.totalorder 1, %s18
      %p231 = scmp.lt.s32.totalorder %s18, 5
      %p232 = pnand %p230, %p231
      %p233 = pneg %p232
      // Predicated region
      $region33: #{tpu_custom_call.1} parent=5 // pred_check
        _
      $region34: #{tpu_custom_call.1} parent=5 // pred_check_branch
        %235 = sbr.rel (%p232) target = $region36
      $region35: #{tpu_custom_call.1} parent=5 // pred_region
        %s236 = ssub.s32 %s18, 1
        %s237 = sand.u32 %s45, 1
        %s238 = scalar_lea.sflag [#allocation3], %s237
        %s239 = sand.u32 %s45, 1
        %s240 = smul.addr %s239, 128
        %s241 = scalar_lea.vmem [#allocation2], %s240
        // Predicated region
        $region37: #{tpu_custom_call.1} parent=35 // pred_check
          %p242 = pneg %p58
        $region38: #{tpu_custom_call.1} parent=35 // pred_check_branch
          %244 = sbr.rel (%p242) target = $region40
        $region39: #{tpu_custom_call.1} parent=35 // pred_region
          %246 = dma.done %s238, 2048
        $region40: #{tpu_custom_call.1} parent=35 // pred_fallthru
          _
        %s247 = sand.u32 %s45, 1
        %s248 = scalar_lea.sflag [#allocation3], %s247
        %s249 = sand.u32 %s45, 1
        %s250 = smul.addr %s249, 128
        %s251 = scalar_lea.vmem [#allocation2], %s250
        %p252 = pneg %p58
        %p253 = pneg %p55
        %p254 = pneg %p79
        %p255 = pneg %p76
        %p256 = pneg %p100
        %p257 = pneg %p97
        %p258 = pneg %p121
        %p259 = pneg %p118
        %p260 = pneg %p149
        %p261 = pneg %p146
        %s262 = smul.u32 8, %s28
        %p263 = scmp.lt.s32.totalorder %s27, 1
        %s264 = scalar_select %p263, %s27, 1
        %p265 = scmp.lt.s32.totalorder %s262, 15
        %s266 = scalar_select %p265, %s262, 15
        %s267 = smul.addr %s266, 2
        %s268 = smul.addr %s264, 32
        %s269 = sadd.s32 %s267, %s268
        %s270 = smul.addr %s269, 8
        %s271 = scalar_lea.vmem %s4, %s270
        %p272 = pneg %p177
        %p273 = pneg %p174
        %s274 = sand.u32 %s164, 1
        %s275 = scalar_lea.sflag [#allocation4], %s274
        %s276 = sand.u32 %s164, 1
        %s277 = smul.addr %s276, 2
        %s278 = scalar_lea.vmem [#allocation5], %s277
        %s279 = smul.u32 8, %s28
        %s280 = smul.u32 8, %s28
        %p281 = scmp.lt.s32.totalorder %s27, 1
        %s282 = scalar_select %p281, %s27, 1
        %p283 = scmp.lt.s32.totalorder %s280, 15
        %s284 = scalar_select %p283, %s280, 15
        %s285 = smul.addr %s284, 2
        %s286 = smul.addr %s282, 32
        %s287 = sadd.s32 %s285, %s286
        %s288 = smul.addr %s287, 8
        %s289 = scalar_lea.vmem %s4, %s288
        %s290 = smul.u32 8, %s28
        %v292 = vld [vmem:[%s241] sm:$0xff]
        %v293 = vld [vmem:[%s241 + $0x8] sm:$0xff]
        %v294 = vld [vmem:[%s241 + $0x10] sm:$0xff]
        %v295 = vld [vmem:[%s241 + $0x18] sm:$0xff]
        %v296 = vld [vmem:[%s241 + $0x20] sm:$0xff]
        %v297 = vld [vmem:[%s241 + $0x28] sm:$0xff]
        %v298 = vld [vmem:[%s241 + $0x30] sm:$0xff]
        %v299 = vld [vmem:[%s241 + $0x38] sm:$0xff]
        %v300 = vld [vmem:[%s241 + $0x40] sm:$0xff]
        %v301 = vld [vmem:[%s241 + $0x48] sm:$0xff]
        %v302 = vld [vmem:[%s241 + $0x50] sm:$0xff]
        %v303 = vld [vmem:[%s241 + $0x58] sm:$0xff]
        %v304 = vld [vmem:[%s241 + $0x60] sm:$0xff]
        %v305 = vld [vmem:[%s241 + $0x68] sm:$0xff]
        %v306 = vld [vmem:[%s241 + $0x70] sm:$0xff]
        %v307 = vld [vmem:[%s241 + $0x78] sm:$0xff]
        %v308 = vld [vmem:[%s1] sm:$0x1]
        %v309 = vld [vmem:[%s2] sm:$0x1]
        %v311 = vperm.slane %v308, 0
        %v313 = vmul.f32 %v292, %v311
        %v314 = vmul.f32 %v293, %v311
        %v315 = vmul.f32 %v294, %v311
        %v316 = vmul.f32 %v295, %v311
        %v317 = vmul.f32 %v296, %v311
        %v318 = vmul.f32 %v297, %v311
        %v319 = vmul.f32 %v298, %v311
        %v320 = vmul.f32 %v299, %v311
        %v321 = vmul.f32 %v300, %v311
        %v322 = vmul.f32 %v301, %v311
        %v323 = vmul.f32 %v302, %v311
        %v324 = vmul.f32 %v303, %v311
        %v325 = vmul.f32 %v304, %v311
        %v326 = vmul.f32 %v305, %v311
        %v327 = vmul.f32 %v306, %v311
        %v328 = vmul.f32 %v307, %v311
        %v330 = vperm.slane %v309, 0
        %v332 = vadd.f32 %v313, %v330
        %v333 = vadd.f32 %v314, %v330
        %v334 = vadd.f32 %v315, %v330
        %v335 = vadd.f32 %v316, %v330
        %v336 = vadd.f32 %v317, %v330
        %v337 = vadd.f32 %v318, %v330
        %v338 = vadd.f32 %v319, %v330
        %v339 = vadd.f32 %v320, %v330
        %v340 = vadd.f32 %v321, %v330
        %v341 = vadd.f32 %v322, %v330
        %v342 = vadd.f32 %v323, %v330
        %v343 = vadd.f32 %v324, %v330
        %v344 = vadd.f32 %v325, %v330
        %v345 = vadd.f32 %v326, %v330
        %v346 = vadd.f32 %v327, %v330
        %v347 = vadd.f32 %v328, %v330
        %v348 = vmax.f32 %v332, 0.0
        %v349 = vmax.f32 %v333, 0.0
        %v350 = vmax.f32 %v334, 0.0
        %v351 = vmax.f32 %v335, 0.0
        %v352 = vmax.f32 %v336, 0.0
        %v353 = vmax.f32 %v337, 0.0
        %v354 = vmax.f32 %v338, 0.0
        %v355 = vmax.f32 %v339, 0.0
        %v356 = vmax.f32 %v340, 0.0
        %v357 = vmax.f32 %v341, 0.0
        %v358 = vmax.f32 %v342, 0.0
        %v359 = vmax.f32 %v343, 0.0
        %v360 = vmax.f32 %v344, 0.0
        %v361 = vmax.f32 %v345, 0.0
        %v362 = vmax.f32 %v346, 0.0
        %v363 = vmax.f32 %v347, 0.0
        %v364 = vpack.c.bf16 %v349, %v348
        %v365 = vpack.c.bf16 %v351, %v350
        %v366 = vpack.c.bf16 %v353, %v352
        %v367 = vpack.c.bf16 %v355, %v354
        %v368 = vpack.c.bf16 %v357, %v356
        %v369 = vpack.c.bf16 %v359, %v358
        %v370 = vpack.c.bf16 %v361, %v360
        %v371 = vpack.c.bf16 %v363, %v362
        %v372 = vld [vmem:[%s3] sm:$0xf]
        %v373 = vld [vmem:[%s3 + $0x4] sm:$0xf]
        %v376 = vunpack.c.l.b16 %v372
        %v377 = vunpack.c.l.b16 %v373
        %v378 = vpack.c.b16 %v377, %v376
        %vm380 = vcmask 130048
        %v382 = vsel %vm380, %v364, 0
        %v385 = vsel %vm380, %v365, 0
        %v388 = vsel %vm380, %v366, 0
        %v391 = vsel %vm380, %v367, 0
        %v394 = vsel %vm380, %v368, 0
        %v397 = vsel %vm380, %v369, 0
        %v400 = vsel %vm380, %v370, 0
        %v403 = vsel %vm380, %v371, 0
        %405 = vmatpush.bf16.msra.mxu0 0
        %406 = vmatpush.bf16.msra.mxu0 0
        %407 = vmatpush.bf16.msra.mxu0 0
        %408 = vmatpush.bf16.msra.mxu0 0
        %409 = vmatpush.bf16.msra.mxu0 0
        %410 = vmatpush.bf16.msra.mxu0 0
        %411 = vmatpush.bf16.msra.mxu0 0
        %412 = vmatpush.bf16.msra.mxu0 %v378
        %413 = vmatmul.bf16.gmra.mxu0 %v382
        %v414 = vpop.f32.mrf.mxu0
        %v415 = vadd.f32 0.0, %v414
        %v416 = vpop.f32.mrf.mxu0
        %v417 = vadd.f32 0.0, %v416
        %418 = vmatmul.bf16.gmra.mxu0 %v385
        %v419 = vpop.f32.mrf.mxu0
        %v420 = vadd.f32 0.0, %v419
        %v421 = vpop.f32.mrf.mxu0
        %v422 = vadd.f32 0.0, %v421
        %423 = vmatmul.bf16.gmra.mxu0 %v388
        %v424 = vpop.f32.mrf.mxu0
        %v425 = vadd.f32 0.0, %v424
        %v426 = vpop.f32.mrf.mxu0
        %v427 = vadd.f32 0.0, %v426
        %428 = vmatmul.bf16.gmra.mxu0 %v391
        %v429 = vpop.f32.mrf.mxu0
        %v430 = vadd.f32 0.0, %v429
        %v431 = vpop.f32.mrf.mxu0
        %v432 = vadd.f32 0.0, %v431
        %433 = vmatmul.bf16.gmra.mxu0 %v394
        %v434 = vpop.f32.mrf.mxu0
        %v435 = vadd.f32 0.0, %v434
        %v436 = vpop.f32.mrf.mxu0
        %v437 = vadd.f32 0.0, %v436
        %438 = vmatmul.bf16.gmra.mxu0 %v397
        %v439 = vpop.f32.mrf.mxu0
        %v440 = vadd.f32 0.0, %v439
        %v441 = vpop.f32.mrf.mxu0
        %v442 = vadd.f32 0.0, %v441
        %443 = vmatmul.bf16.gmra.mxu0 %v400
        %v444 = vpop.f32.mrf.mxu0
        %v445 = vadd.f32 0.0, %v444
        %v446 = vpop.f32.mrf.mxu0
        %v447 = vadd.f32 0.0, %v446
        %448 = vmatmul.bf16.gmra.mxu0 %v403
        %v449 = vpop.f32.mrf.mxu0
        %v450 = vadd.f32 0.0, %v449
        %v451 = vpop.f32.mrf.mxu0
        %v452 = vadd.f32 0.0, %v451
        %453 = vdwg.mxu0
        %vm454 = vcmask 31744
        %455 = vst.msk [vmem:[%s289] sm:$0xff] %vm454, %v415
        %456 = vst.msk [vmem:[%s289 + $0x8] sm:$0xff] %vm454, %v417
        %457 = vst.msk [vmem:[%s289 + $0x10] sm:$0xff] %vm454, %v420
        %458 = vst.msk [vmem:[%s289 + $0x18] sm:$0xff] %vm454, %v422
        %459 = vst.msk [vmem:[%s289 + $0x20] sm:$0xff] %vm454, %v425
        %460 = vst.msk [vmem:[%s289 + $0x28] sm:$0xff] %vm454, %v427
        %461 = vst.msk [vmem:[%s289 + $0x30] sm:$0xff] %vm454, %v430
        %462 = vst.msk [vmem:[%s289 + $0x38] sm:$0xff] %vm454, %v432
        %463 = vst.msk [vmem:[%s289 + $0x40] sm:$0xff] %vm454, %v435
        %464 = vst.msk [vmem:[%s289 + $0x48] sm:$0xff] %vm454, %v437
        %465 = vst.msk [vmem:[%s289 + $0x50] sm:$0xff] %vm454, %v440
        %466 = vst.msk [vmem:[%s289 + $0x58] sm:$0xff] %vm454, %v442
        %467 = vst.msk [vmem:[%s289 + $0x60] sm:$0xff] %vm454, %v445
        %468 = vst.msk [vmem:[%s289 + $0x68] sm:$0xff] %vm454, %v447
        %469 = vst.msk [vmem:[%s289 + $0x70] sm:$0xff] %vm454, %v450
        %470 = vst.msk [vmem:[%s289 + $0x78] sm:$0xff] %vm454, %v452
        %v471 = vsel %vm454, %v415, 0.0
        %v472 = vsel %vm454, %v417, 0.0
        %v473 = vadd.f32 %v471, %v472
        %v474 = vsel %vm454, %v420, 0.0
        %v475 = vadd.f32 %v473, %v474
        %v476 = vsel %vm454, %v422, 0.0
        %v477 = vadd.f32 %v475, %v476
        %v478 = vsel %vm454, %v425, 0.0
        %v479 = vadd.f32 %v477, %v478
        %v480 = vsel %vm454, %v427, 0.0
        %v481 = vadd.f32 %v479, %v480
        %v482 = vsel %vm454, %v430, 0.0
        %v483 = vadd.f32 %v481, %v482
        %v484 = vsel %vm454, %v432, 0.0
        %v485 = vadd.f32 %v483, %v484
        %v486 = vsel %vm454, %v435, 0.0
        %v487 = vadd.f32 %v485, %v486
        %v488 = vsel %vm454, %v437, 0.0
        %v489 = vadd.f32 %v487, %v488
        %v490 = vsel %vm454, %v440, 0.0
        %v491 = vadd.f32 %v489, %v490
        %v492 = vsel %vm454, %v442, 0.0
        %v493 = vadd.f32 %v491, %v492
        %v494 = vsel %vm454, %v445, 0.0
        %v495 = vadd.f32 %v493, %v494
        %v496 = vsel %vm454, %v447, 0.0
        %v497 = vadd.f32 %v495, %v496
        %v498 = vsel %vm454, %v450, 0.0
        %v499 = vadd.f32 %v497, %v498
        %v500 = vsel %vm454, %v452, 0.0
        %v501 = vadd.f32 %v499, %v500
        %v502 = vrot.slane %v501, 4
        %v503 = vadd.f32 %v501, %v502
        %v504 = vrot.slane %v503, 2
        %v505 = vadd.f32 %v503, %v504
        %v506 = vrot.slane %v505, 1
        %v507 = vadd.f32 %v505, %v506
        %vm508 = vcmask 24576
        %509 = vst.msk [vmem:[%s278] sm:$0x1] %vm508, %v507
        %v510 = vmul.f32 %v415, %v415
        %v511 = vmul.f32 %v417, %v417
        %v512 = vmul.f32 %v420, %v420
        %v513 = vmul.f32 %v422, %v422
        %v514 = vmul.f32 %v425, %v425
        %v515 = vmul.f32 %v427, %v427
        %v516 = vmul.f32 %v430, %v430
        %v517 = vmul.f32 %v432, %v432
        %v518 = vmul.f32 %v435, %v435
        %v519 = vmul.f32 %v437, %v437
        %v520 = vmul.f32 %v440, %v440
        %v521 = vmul.f32 %v442, %v442
        %v522 = vmul.f32 %v445, %v445
        %v523 = vmul.f32 %v447, %v447
        %v524 = vmul.f32 %v450, %v450
        %v525 = vmul.f32 %v452, %v452
        %v526 = vsel %vm454, %v510, 0.0
        %v527 = vsel %vm454, %v511, 0.0
        %v528 = vadd.f32 %v526, %v527
        %v529 = vsel %vm454, %v512, 0.0
        %v530 = vadd.f32 %v528, %v529
        %v531 = vsel %vm454, %v513, 0.0
        %v532 = vadd.f32 %v530, %v531
        %v533 = vsel %vm454, %v514, 0.0
        %v534 = vadd.f32 %v532, %v533
        %v535 = vsel %vm454, %v515, 0.0
        %v536 = vadd.f32 %v534, %v535
        %v537 = vsel %vm454, %v516, 0.0
        %v538 = vadd.f32 %v536, %v537
        %v539 = vsel %vm454, %v517, 0.0
        %v540 = vadd.f32 %v538, %v539
        %v541 = vsel %vm454, %v518, 0.0
        %v542 = vadd.f32 %v540, %v541
        %v543 = vsel %vm454, %v519, 0.0
        %v544 = vadd.f32 %v542, %v543
        %v545 = vsel %vm454, %v520, 0.0
        %v546 = vadd.f32 %v544, %v545
        %v547 = vsel %vm454, %v521, 0.0
        %v548 = vadd.f32 %v546, %v547
        %v549 = vsel %vm454, %v522, 0.0
        %v550 = vadd.f32 %v548, %v549
        %v551 = vsel %vm454, %v523, 0.0
        %v552 = vadd.f32 %v550, %v551
        %v553 = vsel %vm454, %v524, 0.0
        %v554 = vadd.f32 %v552, %v553
        %v555 = vsel %vm454, %v525, 0.0
        %v556 = vadd.f32 %v554, %v555
        %v557 = vrot.slane %v556, 4
        %v558 = vadd.f32 %v556, %v557
        %v559 = vrot.slane %v558, 2
        %v560 = vadd.f32 %v558, %v559
        %v561 = vrot.slane %v560, 1
        %v562 = vadd.f32 %v560, %v561
        %563 = vst.msk [vmem:[%s278 + $0x1] sm:$0x1] %vm508, %v562
        %s564 = smul.u32 8, %s28
        %p565 = scmp.lt.s32.totalorder %s27, 1
        %s566 = scalar_select %p565, %s27, 1
        %p567 = scmp.lt.s32.totalorder %s564, 15
        %s568 = scalar_select %p567, %s564, 15
        %s569 = smul.addr %s568, 2
        %s570 = smul.addr %s566, 32
        %s571 = sadd.s32 %s569, %s570
        %s572 = smul.addr %s571, 8
        %s573 = scalar_lea.vmem %s4, %s572
        %s574 = sand.u32 %s164, 1
        %s575 = scalar_lea.sflag [#allocation4], %s574
        %s576 = sand.u32 %s164, 1
        %s577 = smul.addr %s576, 2
        %s578 = scalar_lea.vmem [#allocation5], %s577
        // Predicated region
        $region41: #{tpu_custom_call.1} parent=35 // pred_check
          %p579 = pneg %p146
        $region42: #{tpu_custom_call.1} parent=35 // pred_check_branch
          %581 = sbr.rel (%p579) target = $region44
        $region43: #{tpu_custom_call.1} parent=35 // pred_region
          %s582 = smul.u32 8, %s28
        $region44: #{tpu_custom_call.1} parent=35 // pred_fallthru
          _
        // Predicated region
        $region45: #{tpu_custom_call.1} parent=35 // pred_check
          %p583 = pneg %p174
        $region46: #{tpu_custom_call.1} parent=35 // pred_check_branch
          %585 = sbr.rel (%p583) target = $region48
        $region47: #{tpu_custom_call.1} parent=35 // pred_region
          %587 = vsyncadd %s575, 0
          %s588 = smul.addr %s27, 2
          %s589 = sadd.s32 %s28, %s588
          %s590 = smul.addr %s589, 2
          %s591 = scalar_lea.hbm %s5, %s590
          %s593 = sshll.u32 %s578, 4
          %s594 = int_to_ptr.vmem [resolvable:$true] %s593
          %s595 = sshll.u32 %s591, 4
          %s596 = int_to_ptr.hbm [resolvable:$true] %s595
          %598 = dma.vmem_to_hbm [thread:$0]  %s594, 32, %s596, %s575
        $region48: #{tpu_custom_call.1} parent=35 // pred_fallthru
          _
      $region36: #{tpu_custom_call.1} parent=5 // pred_fallthru
        _
      %p599 = scmp.le.s32.totalorder 2, %s18
      // Predicated region
      $region49: #{tpu_custom_call.1} parent=5 // pred_check
        %p600 = pneg %p599
      $region50: #{tpu_custom_call.1} parent=5 // pred_check_branch
        %602 = sbr.rel (%p600) target = $region52
      $region51: #{tpu_custom_call.1} parent=5 // pred_region
        %s603 = ssub.s32 %s18, 2
        // Predicated region
        $region53: #{tpu_custom_call.1} parent=51 // pred_check
          %p604 = pneg %p152
        $region54: #{tpu_custom_call.1} parent=51 // pred_check_branch
          %606 = sbr.rel (%p604) target = $region56
        $region55: #{tpu_custom_call.1} parent=51 // pred_region
          %s607 = smul.u32 8, %s30
          %p608 = scmp.lt.s32.totalorder %s29, 1
          %s609 = scalar_select %p608, %s29, 1
          %p610 = scmp.lt.s32.totalorder %s607, 15
          %s611 = scalar_select %p610, %s607, 15
          %s612 = smul.addr %s611, 2
          %s613 = smul.addr %s609, 32
          %s614 = sadd.s32 %s612, %s613
          %s615 = smul.addr %s614, 8
          %s616 = scalar_lea.vmem %s4, %s615
        $region56: #{tpu_custom_call.1} parent=51 // pred_fallthru
          _
        // Predicated region
        $region57: #{tpu_custom_call.1} parent=51 // pred_check
          %p617 = pneg %p180
        $region58: #{tpu_custom_call.1} parent=51 // pred_check_branch
          %619 = sbr.rel (%p617) target = $region60
        $region59: #{tpu_custom_call.1} parent=51 // pred_region
          %s620 = sand.u32 %s165, 1
          %s621 = scalar_lea.sflag [#allocation4], %s620
          %s622 = sand.u32 %s165, 1
          %s623 = smul.addr %s622, 2
          %s624 = scalar_lea.vmem [#allocation5], %s623
          %626 = dma.done %s621, 32
        $region60: #{tpu_custom_call.1} parent=51 // pred_fallthru
          _
      $region52: #{tpu_custom_call.1} parent=5 // pred_fallthru
        _
    $region6: #{tpu_custom_call.1} parent=1 // loop_footer
      %s22 = sadd.s32 1, %s18
    $region7: #{tpu_custom_call.1} parent=1 // loop_footer_branch
      %17 = sbr.rel target = $region3
    $region8: #{tpu_custom_call.1} parent=1 // loop_exit
      _
    %627 = vsyncpa [#allocation3], 1
    %s628 = scalar_lea.sflag [#allocation3], 1
    %629 = vsyncpa %s628, 1
    %630 = vsyncpa [#allocation4], 1
    %s631 = scalar_lea.sflag [#allocation4], 1
    %632 = vsyncpa %s631, 1

</llo_original>
